<compile_context>
chip_gen: v6e
topology: v6e:2x2x1
jax: 0.10.0
libtpu: 0.0.40
codegen_flags: <defaults>
</compile_context>

<pallas_src>
import functools
import math

import jax
import jax.numpy as jnp
from jax.experimental import pallas as pl
from jax.experimental.pallas import tpu as pltpu


# ----------------------------------------------------------------------------
# Fused kernel: per (batch, q-tile, k-tile) -> batched-head flash attention,
# fc_out fused on the last k-tile.
# ----------------------------------------------------------------------------
def _flash_mha_fc_kernel(q_ref, k_ref, v_ref, bias_ref, wT_ref, b_ref, o_ref,
                         m_sc, l_sc, acc_sc, *, heads, scale):
    kv = pl.program_id(2)

    @pl.when(kv == 0)
    def _init():
        m_sc[...] = jnp.full_like(m_sc, -jnp.inf)
        l_sc[...] = jnp.zeros_like(l_sc)
        acc_sc[...] = jnp.zeros_like(acc_sc)

    q = q_ref[0]          # (H,  tq, D) bf16
    k = k_ref[0]          # (H,  tk, D) bf16
    v = v_ref[0]          # (H,  tk, D) bf16
    bias = bias_ref[0]    # (1|H, tq, tk) bf16 additive mask (0 / -1e20)

    # All heads at once — leading-batch dot_general, no per-head lane slicing.
    s = jnp.einsum("hqd,hkd->hqk", q, k,
                   preferred_element_type=jnp.float32)          # (H, tq, tk) f32
    # Scale applied in-kernel (VPU, hides under MXU). Additive -1e20 bias:
    # masked logits underflow exp() exactly like torch's masked_fill (fully
    # masked rows fall back to a uniform softmax in both).
    s = s * scale + bias.astype(jnp.float32)

    # Online softmax update (all f32).
    m_prev = m_sc[...]
    m_new = jnp.maximum(m_prev, jnp.max(s, axis=-1, keepdims=True))
    alpha = jnp.exp(m_prev - m_new)
    p = jnp.exp(s - m_new)
    l_sc[...] = alpha * l_sc[...] + jnp.sum(p, axis=-1, keepdims=True)
    acc_sc[...] = alpha * acc_sc[...] + jnp.einsum(
        "hqk,hkd->hqd", p.astype(jnp.bfloat16), v,
        preferred_element_type=jnp.float32)
    m_sc[...] = m_new

    @pl.when(kv == pl.num_programs(2) - 1)
    def _finalize():
        # Normalize (EUP reciprocal) and fuse fc_out with per-head accumulation:
        # no lane-axis concat of (tq, D) pieces, one (tq, E) f32 accumulator.
        attn = acc_sc[...] * pl.reciprocal(l_sc[...], approx=True)   # (H,tq,D)
        tq = attn.shape[1]
        e_out = wT_ref.shape[-1]
        y = jnp.zeros((tq, e_out), jnp.float32)
        for h in range(heads):                       # static unroll, major-dim index
            y = y + jnp.dot(attn[h].astype(jnp.bfloat16), wT_ref[h],
                            preferred_element_type=jnp.float32)
        o_ref[0] = (y + b_ref[...].astype(jnp.float32)).astype(o_ref.dtype)


def flash_mha_fc(q_h, k_h, v_h, bias, wT3, b_row, *, scale,
                 out_dtype=jnp.bfloat16, q_tile=256, k_tile=512):
    """q_h/k_h/v_h: (N, H, S, D) bf16; bias: (1|N, 1|H, Q, K) bf16 additive;
    wT3: (H, D, E) bf16 (fc weight, pre-transposed/reshaped); b_row: (1, E) f32.
    Returns (N, Q, E) in out_dtype."""
    N, H, Q, D = q_h.shape
    K = k_h.shape[2]
    E = wT3.shape[-1]
    Nb, Hb = bias.shape[0], bias.shape[1]

    tq = min(q_tile, Q)
    tk = min(k_tile, K)
    # TODO(synk): pad ragged tail tiles instead of requiring exact division.
    assert Q % tq == 0 and K % tk == 0, "Q/K must divide the chosen tile sizes"
    nq, nk = Q // tq, K // tk

    out_itemsize = jnp.dtype(out_dtype).itemsize

    # Explicit VMEM budget: sized from the tiles, capped at 64 MiB so the same
    # setting is valid on v7x (64 MiB physical) as well as v5e/v6e (128 MiB).
    blk_q = H * tq * D * 2
    blk_kv = H * tk * D * 2
    blk_bias = Hb * tq * tk * 2
    blk_out = tq * E * out_itemsize
    w_bytes = H * D * E * 2 + E * 4
    scratch_bytes = H * tq * (D + 2) * 4
    est = (2 * blk_q + 4 * blk_kv + 2 * blk_bias + 2 * blk_out
           + w_bytes + scratch_bytes)
    vmem_limit = int(min(64 * 2 ** 20, max(32 * 2 ** 20, 2 * est)))

    cost = pl.CostEstimate(
        flops=int(4 * N * H * Q * K * D + 2 * N * Q * E * E),
        transcendentals=int(N * H * Q * K),
        bytes_accessed=int(2 * (q_h.size + k_h.size + v_h.size + bias.size
                                + wT3.size) + 4 * b_row.size
                           + N * Q * E * out_itemsize),
    )

    kernel = functools.partial(_flash_mha_fc_kernel, heads=H, scale=scale)

    return pl.pallas_call(
        kernel,
        out_shape=jax.ShapeDtypeStruct((N, Q, E), out_dtype),
        grid=(N, nq, nk),
        in_specs=[
            pl.BlockSpec((1, H, tq, D), lambda n, i, kk: (n, 0, i, 0)),   # q
            pl.BlockSpec((1, H, tk, D), lambda n, i, kk: (n, 0, kk, 0)),  # k (streamed)
            pl.BlockSpec((1, H, tk, D), lambda n, i, kk: (n, 0, kk, 0)),  # v (streamed)
            pl.BlockSpec((1, Hb, tq, tk),                                 # additive mask
                         lambda n, i, kk: (n if Nb > 1 else 0, 0, i, kk)),
            pl.BlockSpec((H, D, E), lambda n, i, kk: (0, 0, 0),           # W^T (H,D,E)
                         pipeline_mode=pl.Buffered(1)),
            pl.BlockSpec((1, E), lambda n, i, kk: (0, 0),                 # bias vector
                         pipeline_mode=pl.Buffered(1)),
        ],
        out_specs=pl.BlockSpec((1, tq, E), lambda n, i, kk: (n, i, 0)),
        scratch_shapes=[
            pltpu.VMEM((H, tq, 1), jnp.float32),   # m (running max)
            pltpu.VMEM((H, tq, 1), jnp.float32),   # l (running denom)
            pltpu.VMEM((H, tq, D), jnp.float32),   # un-normalized attention acc
        ],
        compiler_params=pltpu.CompilerParams(
            dimension_semantics=("parallel", "parallel", "arbitrary"),
            vmem_limit_bytes=vmem_limit),
        cost_estimate=cost,
    )(q_h, k_h, v_h, bias, wT3, b_row)


# ----------------------------------------------------------------------------
# Module wrapper
# ----------------------------------------------------------------------------
class SelfAttentionPallas:
    def __init__(self, embed_size, heads, key, out_dtype=jnp.bfloat16):
        assert embed_size % heads == 0, "Embed size needs to be divisible by heads"
        self.embed_size = embed_size
        self.heads = heads
        self.heads_dim = embed_size // heads
        self.out_dtype = out_dtype   # set jnp.float32 if downstream needs f32
        # Deterministic init (torch Linear default: U(-1/sqrt(fan_in), ...)).
        k_w, k_b = jax.random.split(key)
        bound = 1.0 / math.sqrt(embed_size)
        self.fc_w = jax.random.uniform(
            k_w, (embed_size, embed_size), minval=-bound, maxval=bound,
            dtype=jnp.float32)
        self.fc_b = jax.random.uniform(
            k_b, (embed_size,), minval=-bound, maxval=bound, dtype=jnp.float32)
        # Kernel-side parameters prepared ONCE: W^T reshaped to (H, D, E) so the
        # kernel can take per-head sublane slices via a major-dim index; bf16
        # for the MXU.  Bias kept f32 (added to the f32 accumulator).
        self.fc_wT3 = jnp.asarray(
            self.fc_w.T.reshape(heads, self.heads_dim, embed_size),
            dtype=jnp.bfloat16)
        self.fc_b_row = self.fc_b.reshape(1, embed_size)
        # values/keys/queries Linear layers exist in the torch module but are
        # never used in its forward(), so they are intentionally not created.

    def __call__(self, values, keys, query, mask, *, q_tile=256, k_tile=512):
        N, q_len, _ = query.shape
        k_len = keys.shape[1]
        H, D = self.heads, self.heads_dim
        scale = 1.0 / math.sqrt(self.embed_size)

        def to_heads(x):
            # free reshape + one head-major transpose (amortized: removes every
            # per-step XLU relayout and lets all heads share one MXU pass).
            n, s, _ = x.shape
            return jnp.swapaxes(
                x.astype(jnp.bfloat16).reshape(n, s, H, D), 1, 2)

        q_h = to_heads(query)
        k_h = to_heads(keys)
        v_h = to_heads(values)

        if mask is None:
            bias = jnp.zeros((1, 1, q_len, k_len), dtype=jnp.bfloat16)
        else:
            m = jnp.asarray(mask)
            m4 = m.reshape((1,) * (4 - m.ndim) + m.shape)     # left-pad to 4-D
            Nb, Hb = m4.shape[0], m4.shape[1]
            assert Nb in (1, N) and Hb in (1, H), \
                "mask must be broadcastable against (N, heads, Q, K)"
            # Additive bias in bf16: 0 where attended, -1e20 where masked.
            # Per-head masks are preserved (Hb == H) instead of being dropped.
            bias = jnp.where(m4 == 0, jnp.float32(-1e20), jnp.float32(0.0))
            bias = jnp.broadcast_to(
                bias, (Nb, Hb, q_len, k_len)).astype(jnp.bfloat16)

        return flash_mha_fc(q_h, k_h, v_h, bias, self.fc_wT3, self.fc_b_row,
                            scale=scale, out_dtype=self.out_dtype,
                            q_tile=q_tile, k_tile=k_tile)


# ----------------------------------------------------------------------------
# Pure-JAX f32 reference (mirrors the torch forward) for validation
# ----------------------------------------------------------------------------
def reference_forward(mod, values, keys, query, mask):
    N, q_len, _ = query.shape
    v_len, k_len = values.shape[1], keys.shape[1]
    H, D = mod.heads, mod.heads_dim
    v = values.reshape(N, v_len, H, D)
    k = keys.reshape(N, k_len, H, D)
    q = query.reshape(N, q_len, H, D)
    energy = jnp.einsum("nqhd,nkhd->nhqk", q, k)
    if mask is not None:
        energy = jnp.where(mask == 0, -1e20, energy)
    attn = jax.nn.softmax(energy / math.sqrt(mod.embed_size), axis=3)
    out = jnp.einsum("nhql,nlhd->nqhd", attn, v).reshape(N, q_len, H * D)
    return out @ mod.fc_w.T + mod.fc_b


if __name__ == "__main__":
    key = jax.random.PRNGKey(0)
    k_in, k_mask, k_param = jax.random.split(key, 3)

    N, SEQ, EMBED, HEADS = 2, 8, 32, 2

    kv_key, kk_key, kq_key = jax.random.split(k_in, 3)
    values = jax.random.normal(kv_key, (N, SEQ, EMBED), dtype=jnp.float32)
    keys = jax.random.normal(kk_key, (N, SEQ, EMBED), dtype=jnp.float32)
    query = jax.random.normal(kq_key, (N, SEQ, EMBED), dtype=jnp.float32)
    # mask broadcastable to (N, heads, q_len, k_len); 0 entries get masked out
    mask = (jax.random.uniform(k_mask, (N, 1, SEQ, SEQ)) > 0.2).astype(jnp.float32)

    mod = SelfAttentionPallas(EMBED, HEADS, k_param)

    out = mod(values, keys, query, mask)
    out = jax.block_until_ready(out)

    ref = reference_forward(mod, values, keys, query, mask)
    assert out.shape == (N, SEQ, EMBED)
    # Tolerance reflects bf16 MXU operands + bf16 output (softmax/acc are f32).
    assert jnp.allclose(out.astype(jnp.float32), ref, atol=5e-2, rtol=5e-2), \
        "mismatch vs reference"

    print("KERNEL_OK")
</pallas_src>

<mosaic_0001>
module attributes {stable_mosaic.version = 11 : i64} {
  func.func @_flash_mha_fc_kernel(%arg0: i32, %arg1: i32, %arg2: i32, %arg3: memref<1x2x8x16xbf16, #tpu.memory_space<vmem>>, %arg4: memref<1x2x8x16xbf16, #tpu.memory_space<vmem>>, %arg5: memref<1x2x8x16xbf16, #tpu.memory_space<vmem>>, %arg6: memref<1x1x8x8xbf16, #tpu.memory_space<vmem>>, %arg7: memref<2x16x32xbf16, #tpu.memory_space<vmem>>, %arg8: memref<1x32xf32, #tpu.memory_space<vmem>>, %arg9: memref<1x8x32xbf16, #tpu.memory_space<vmem>>, %arg10: memref<2x8x1xf32, #tpu.memory_space<vmem>>, %arg11: memref<2x8x1xf32, #tpu.memory_space<vmem>>, %arg12: memref<2x8x16xf32, #tpu.memory_space<vmem>>) attributes {dimension_semantics = [#tpu.dimension_semantics<parallel>, #tpu.dimension_semantics<parallel>, #tpu.dimension_semantics<arbitrary>], iteration_bounds = array<i64: 2, 1, 1>, scalar_prefetch = 0 : i64, scratch_operands = 3 : i64, tpu.core_type = #tpu.core_type<tc>, window_params = [{transform_indices = @transform_0, window_bounds = array<i64: 1, 2, 8, 16>}, {transform_indices = @transform_1, window_bounds = array<i64: 1, 2, 8, 16>}, {transform_indices = @transform_2, window_bounds = array<i64: 1, 2, 8, 16>}, {transform_indices = @transform_3, window_bounds = array<i64: 1, 1, 8, 8>}, {pipeline_mode = #tpu.pipeline_mode<synchronous>, transform_indices = @transform_4, window_bounds = array<i64: 2, 16, 32>}, {pipeline_mode = #tpu.pipeline_mode<synchronous>, transform_indices = @transform_5, window_bounds = array<i64: 1, 32>}, {transform_indices = @transform_6, window_bounds = array<i64: 1, 8, 32>}]} {
    %c0_i32 = arith.constant 0 : i32
    %0 = arith.cmpi eq, %arg2, %c0_i32 : i32
    %1 = arith.extui %0 : i1 to i32
    %c0_i32_0 = arith.constant 0 : i32
    %2 = arith.cmpi ne, %1, %c0_i32_0 : i32
    scf.if %2 {
      %cst_40 = arith.constant 0xFF800000 : f32
      %43 = vector.broadcast %cst_40 : f32 to vector<2x8x1xf32>
      %c0_41 = arith.constant 0 : index
      %c0_42 = arith.constant 0 : index
      %c0_43 = arith.constant 0 : index
      %44 = vector.load %arg10[%c0_41, %c0_42, %c0_43] : memref<2x8x1xf32, #tpu.memory_space<vmem>>, vector<2x8x1xf32>
      tpu.vector_store %arg10[%c0_41, %c0_42, %c0_43], %43 {strides = array<i32>} : memref<2x8x1xf32, #tpu.memory_space<vmem>>, vector<2x8x1xf32>,
      %cst_44 = arith.constant 0.000000e+00 : f32
      %45 = vector.broadcast %cst_44 : f32 to vector<2x8x1xf32>
      %c0_45 = arith.constant 0 : index
      %c0_46 = arith.constant 0 : index
      %c0_47 = arith.constant 0 : index
      %46 = vector.load %arg11[%c0_45, %c0_46, %c0_47] : memref<2x8x1xf32, #tpu.memory_space<vmem>>, vector<2x8x1xf32>
      tpu.vector_store %arg11[%c0_45, %c0_46, %c0_47], %45 {strides = array<i32>} : memref<2x8x1xf32, #tpu.memory_space<vmem>>, vector<2x8x1xf32>,
      %cst_48 = arith.constant 0.000000e+00 : f32
      %47 = vector.broadcast %cst_48 : f32 to vector<2x8x16xf32>
      %c0_49 = arith.constant 0 : index
      %c0_50 = arith.constant 0 : index
      %c0_51 = arith.constant 0 : index
      %48 = vector.load %arg12[%c0_49, %c0_50, %c0_51] : memref<2x8x16xf32, #tpu.memory_space<vmem>>, vector<2x8x16xf32>
      tpu.vector_store %arg12[%c0_49, %c0_50, %c0_51], %47 {strides = array<i32>} : memref<2x8x16xf32, #tpu.memory_space<vmem>>, vector<2x8x16xf32>,
    } else {
    }
    %c0 = arith.constant 0 : index
    %c0_1 = arith.constant 0 : index
    %c0_2 = arith.constant 0 : index
    %c0_3 = arith.constant 0 : index
    %3 = vector.load %arg3[%c0, %c0_1, %c0_2, %c0_3] : memref<1x2x8x16xbf16, #tpu.memory_space<vmem>>, vector<1x2x8x16xbf16>
    %4 = vector.shape_cast %3 : vector<1x2x8x16xbf16> to vector<2x8x16xbf16>
    %c0_4 = arith.constant 0 : index
    %c0_5 = arith.constant 0 : index
    %c0_6 = arith.constant 0 : index
    %c0_7 = arith.constant 0 : index
    %5 = vector.load %arg4[%c0_4, %c0_5, %c0_6, %c0_7] : memref<1x2x8x16xbf16, #tpu.memory_space<vmem>>, vector<1x2x8x16xbf16>
    %6 = vector.shape_cast %5 : vector<1x2x8x16xbf16> to vector<2x8x16xbf16>
    %c0_8 = arith.constant 0 : index
    %c0_9 = arith.constant 0 : index
    %c0_10 = arith.constant 0 : index
    %c0_11 = arith.constant 0 : index
    %7 = vector.load %arg5[%c0_8, %c0_9, %c0_10, %c0_11] : memref<1x2x8x16xbf16, #tpu.memory_space<vmem>>, vector<1x2x8x16xbf16>
    %8 = vector.shape_cast %7 : vector<1x2x8x16xbf16> to vector<2x8x16xbf16>
    %c0_12 = arith.constant 0 : index
    %c0_13 = arith.constant 0 : index
    %c0_14 = arith.constant 0 : index
    %c0_15 = arith.constant 0 : index
    %9 = vector.load %arg6[%c0_12, %c0_13, %c0_14, %c0_15] : memref<1x1x8x8xbf16, #tpu.memory_space<vmem>>, vector<1x1x8x8xbf16>
    %10 = vector.shape_cast %9 : vector<1x1x8x8xbf16> to vector<1x8x8xbf16>
    "tpu.trace_start"() <{level = 10 : i32, message = "hqd,hkd->hqk"}> : () -> ()
    %cst = arith.constant dense<0.000000e+00> : vector<2x8x8xf32>
    %11 = tpu.matmul %4, %6, %cst {dimension_numbers = #tpu.dot_dimension_numbers<[2], [2], [1], [1], [0, 0, 0, 1, 1, 1], [0], [0]>} : vector<2x8x16xbf16>, vector<2x8x16xbf16>, vector<2x8x8xf32> -> vector<2x8x8xf32>
    "tpu.trace_stop"() : () -> ()
    %cst_16 = arith.constant 0.176776692 : f32
    %12 = vector.broadcast %cst_16 : f32 to vector<2x8x8xf32>
    %13 = arith.mulf %11, %12 : vector<2x8x8xf32>
    %14 = arith.extf %10 : vector<1x8x8xbf16> to vector<1x8x8xf32>
    %15 = vector.broadcast %14 : vector<1x8x8xf32> to vector<2x8x8xf32>
    %16 = arith.addf %13, %15 : vector<2x8x8xf32>
    %c0_17 = arith.constant 0 : index
    %c0_18 = arith.constant 0 : index
    %c0_19 = arith.constant 0 : index
    %17 = vector.load %arg10[%c0_17, %c0_18, %c0_19] : memref<2x8x1xf32, #tpu.memory_space<vmem>>, vector<2x8x1xf32>
    %cst_20 = arith.constant dense<0xFF800000> : vector<2x8xf32>
    %18 = vector.multi_reduction <maximumf>, %16, %cst_20 [2] : vector<2x8x8xf32> to vector<2x8xf32>
    %19 = vector.shape_cast %18 : vector<2x8xf32> to vector<2x8x1xf32>
    %20 = arith.maximumf %17, %19 : vector<2x8x1xf32>
    %21 = arith.subf %17, %20 : vector<2x8x1xf32>
    %22 = math.exp %21 : vector<2x8x1xf32>
    %23 = vector.broadcast %20 : vector<2x8x1xf32> to vector<2x8x8xf32>
    %24 = arith.subf %16, %23 : vector<2x8x8xf32>
    %25 = math.exp %24 : vector<2x8x8xf32>
    %c0_21 = arith.constant 0 : index
    %c0_22 = arith.constant 0 : index
    %c0_23 = arith.constant 0 : index
    %26 = vector.load %arg11[%c0_21, %c0_22, %c0_23] : memref<2x8x1xf32, #tpu.memory_space<vmem>>, vector<2x8x1xf32>
    %27 = arith.mulf %22, %26 : vector<2x8x1xf32>
    %cst_24 = arith.constant dense<0.000000e+00> : vector<2x8xf32>
    %28 = vector.multi_reduction <add>, %25, %cst_24 [2] : vector<2x8x8xf32> to vector<2x8xf32>
    %29 = vector.shape_cast %28 : vector<2x8xf32> to vector<2x8x1xf32>
    %30 = arith.addf %27, %29 : vector<2x8x1xf32>
    %c0_25 = arith.constant 0 : index
    %c0_26 = arith.constant 0 : index
    %c0_27 = arith.constant 0 : index
    %31 = vector.load %arg11[%c0_25, %c0_26, %c0_27] : memref<2x8x1xf32, #tpu.memory_space<vmem>>, vector<2x8x1xf32>
    tpu.vector_store %arg11[%c0_25, %c0_26, %c0_27], %30 {strides = array<i32>} : memref<2x8x1xf32, #tpu.memory_space<vmem>>, vector<2x8x1xf32>,
    %c0_28 = arith.constant 0 : index
    %c0_29 = arith.constant 0 : index
    %c0_30 = arith.constant 0 : index
    %32 = vector.load %arg12[%c0_28, %c0_29, %c0_30] : memref<2x8x16xf32, #tpu.memory_space<vmem>>, vector<2x8x16xf32>
    %33 = vector.broadcast %22 : vector<2x8x1xf32> to vector<2x8x16xf32>
    %34 = arith.mulf %33, %32 : vector<2x8x16xf32>
    %35 = arith.truncf %25 : vector<2x8x8xf32> to vector<2x8x8xbf16>
    "tpu.trace_start"() <{level = 10 : i32, message = "hqk,hkd->hqd"}> : () -> ()
    %cst_31 = arith.constant dense<0.000000e+00> : vector<2x8x16xf32>
    %36 = tpu.matmul %35, %8, %cst_31 {dimension_numbers = #tpu.dot_dimension_numbers<[2], [1], [1], [2], [0, 0, 0, 1, 1, 2], [0], [0]>} : vector<2x8x8xbf16>, vector<2x8x16xbf16>, vector<2x8x16xf32> -> vector<2x8x16xf32>
    "tpu.trace_stop"() : () -> ()
    %37 = arith.addf %34, %36 : vector<2x8x16xf32>
    %c0_32 = arith.constant 0 : index
    %c0_33 = arith.constant 0 : index
    %c0_34 = arith.constant 0 : index
    %38 = vector.load %arg12[%c0_32, %c0_33, %c0_34] : memref<2x8x16xf32, #tpu.memory_space<vmem>>, vector<2x8x16xf32>
    tpu.vector_store %arg12[%c0_32, %c0_33, %c0_34], %37 {strides = array<i32>} : memref<2x8x16xf32, #tpu.memory_space<vmem>>, vector<2x8x16xf32>,
    %c0_35 = arith.constant 0 : index
    %c0_36 = arith.constant 0 : index
    %c0_37 = arith.constant 0 : index
    %39 = vector.load %arg10[%c0_35, %c0_36, %c0_37] : memref<2x8x1xf32, #tpu.memory_space<vmem>>, vector<2x8x1xf32>
    tpu.vector_store %arg10[%c0_35, %c0_36, %c0_37], %20 {strides = array<i32>} : memref<2x8x1xf32, #tpu.memory_space<vmem>>, vector<2x8x1xf32>,
    %c0_i32_38 = arith.constant 0 : i32
    %40 = arith.cmpi eq, %arg2, %c0_i32_38 : i32
    %41 = arith.extui %40 : i1 to i32
    %c0_i32_39 = arith.constant 0 : i32
    %42 = arith.cmpi ne, %41, %c0_i32_39 : i32
    scf.if %42 {
      %c0_40 = arith.constant 0 : index
      %c0_41 = arith.constant 0 : index
      %c0_42 = arith.constant 0 : index
      %43 = vector.load %arg12[%c0_40, %c0_41, %c0_42] : memref<2x8x16xf32, #tpu.memory_space<vmem>>, vector<2x8x16xf32>
      %c0_43 = arith.constant 0 : index
      %c0_44 = arith.constant 0 : index
      %c0_45 = arith.constant 0 : index
      %44 = vector.load %arg11[%c0_43, %c0_44, %c0_45] : memref<2x8x1xf32, #tpu.memory_space<vmem>>, vector<2x8x1xf32>
      %45 = tpu.reciprocal %44 {approx = true} : vector<2x8x1xf32> -> vector<2x8x1xf32>
      %46 = vector.broadcast %45 : vector<2x8x1xf32> to vector<2x8x16xf32>
      %47 = arith.mulf %43, %46 : vector<2x8x16xf32>
      %cst_46 = arith.constant 0.000000e+00 : f32
      %48 = vector.broadcast %cst_46 : f32 to vector<8x32xf32>
      %49 = vector.extract_strided_slice %47 {offsets = [0, 0, 0], sizes = [1, 8, 16], strides = [1, 1, 1]} : vector<2x8x16xf32> to vector<1x8x16xf32>
      %50 = vector.shape_cast %49 : vector<1x8x16xf32> to vector<8x16xf32>
      %51 = arith.truncf %50 : vector<8x16xf32> to vector<8x16xbf16>
      %c0_47 = arith.constant 0 : index
      %c0_48 = arith.constant 0 : index
      %c0_49 = arith.constant 0 : index
      %52 = vector.load %arg7[%c0_47, %c0_48, %c0_49] : memref<2x16x32xbf16, #tpu.memory_space<vmem>>, vector<1x16x32xbf16>
      %53 = vector.shape_cast %52 : vector<1x16x32xbf16> to vector<16x32xbf16>
      %cst_50 = arith.constant dense<0.000000e+00> : vector<8x32xf32>
      %54 = tpu.matmul %51, %53, %cst_50 {dimension_numbers = #tpu.dot_dimension_numbers<[1], [0], [0], [1], [0, 0, 1, 1], [], []>} : vector<8x16xbf16>, vector<16x32xbf16>, vector<8x32xf32> -> vector<8x32xf32>
      %55 = arith.addf %48, %54 : vector<8x32xf32>
      %56 = vector.extract_strided_slice %47 {offsets = [1, 0, 0], sizes = [1, 8, 16], strides = [1, 1, 1]} : vector<2x8x16xf32> to vector<1x8x16xf32>
      %57 = vector.shape_cast %56 : vector<1x8x16xf32> to vector<8x16xf32>
      %58 = arith.truncf %57 : vector<8x16xf32> to vector<8x16xbf16>
      %c1 = arith.constant 1 : index
      %c0_51 = arith.constant 0 : index
      %c0_52 = arith.constant 0 : index
      %59 = vector.load %arg7[%c1, %c0_51, %c0_52] : memref<2x16x32xbf16, #tpu.memory_space<vmem>>, vector<1x16x32xbf16>
      %60 = vector.shape_cast %59 : vector<1x16x32xbf16> to vector<16x32xbf16>
      %cst_53 = arith.constant dense<0.000000e+00> : vector<8x32xf32>
      %61 = tpu.matmul %58, %60, %cst_53 {dimension_numbers = #tpu.dot_dimension_numbers<[1], [0], [0], [1], [0, 0, 1, 1], [], []>} : vector<8x16xbf16>, vector<16x32xbf16>, vector<8x32xf32> -> vector<8x32xf32>
      %62 = arith.addf %55, %61 : vector<8x32xf32>
      %c0_54 = arith.constant 0 : index
      %c0_55 = arith.constant 0 : index
      %63 = vector.load %arg8[%c0_54, %c0_55] : memref<1x32xf32, #tpu.memory_space<vmem>>, vector<1x32xf32>
      %64 = vector.broadcast %63 : vector<1x32xf32> to vector<8x32xf32>
      %65 = arith.addf %62, %64 : vector<8x32xf32>
      %66 = arith.truncf %65 : vector<8x32xf32> to vector<8x32xbf16>
      %c0_56 = arith.constant 0 : index
      %c0_57 = arith.constant 0 : index
      %c0_58 = arith.constant 0 : index
      %67 = vector.load %arg9[%c0_56, %c0_57, %c0_58] : memref<1x8x32xbf16, #tpu.memory_space<vmem>>, vector<1x8x32xbf16>
      %68 = vector.shape_cast %67 : vector<1x8x32xbf16> to vector<8x32xbf16>
      %69 = vector.shape_cast %66 : vector<8x32xbf16> to vector<1x8x32xbf16>
      tpu.vector_store %arg9[%c0_56, %c0_57, %c0_58], %69 {strides = array<i32>} : memref<1x8x32xbf16, #tpu.memory_space<vmem>>, vector<1x8x32xbf16>,
    } else {
    }
    return
  }
  func.func @transform_0(%arg0: i32, %arg1: i32, %arg2: i32) -> (i32, i32, i32, i32) {
    %c0_i32 = arith.constant 0 : i32
    %c0_i32_0 = arith.constant 0 : i32
    %c0_i32_1 = arith.constant 0 : i32
    return %arg0, %c0_i32, %arg1, %c0_i32_0 : i32, i32, i32, i32
  }
  func.func @transform_1(%arg0: i32, %arg1: i32, %arg2: i32) -> (i32, i32, i32, i32) {
    %c0_i32 = arith.constant 0 : i32
    %c0_i32_0 = arith.constant 0 : i32
    %c0_i32_1 = arith.constant 0 : i32
    return %arg0, %c0_i32, %arg2, %c0_i32_0 : i32, i32, i32, i32
  }
  func.func @transform_2(%arg0: i32, %arg1: i32, %arg2: i32) -> (i32, i32, i32, i32) {
    %c0_i32 = arith.constant 0 : i32
    %c0_i32_0 = arith.constant 0 : i32
    %c0_i32_1 = arith.constant 0 : i32
    return %arg0, %c0_i32, %arg2, %c0_i32_0 : i32, i32, i32, i32
  }
  func.func @transform_3(%arg0: i32, %arg1: i32, %arg2: i32) -> (i32, i32, i32, i32) {
    %c0_i32 = arith.constant 0 : i32
    %c0_i32_0 = arith.constant 0 : i32
    return %arg0, %c0_i32, %arg1, %arg2 : i32, i32, i32, i32
  }
  func.func @transform_4(%arg0: i32, %arg1: i32, %arg2: i32) -> (i32, i32, i32) {
    %c0_i32 = arith.constant 0 : i32
    %c0_i32_0 = arith.constant 0 : i32
    %c0_i32_1 = arith.constant 0 : i32
    %c0_i32_2 = arith.constant 0 : i32
    return %c0_i32, %c0_i32_0, %c0_i32_1 : i32, i32, i32
  }
  func.func @transform_5(%arg0: i32, %arg1: i32, %arg2: i32) -> (i32, i32) {
    %c0_i32 = arith.constant 0 : i32
    %c0_i32_0 = arith.constant 0 : i32
    %c0_i32_1 = arith.constant 0 : i32
    return %c0_i32, %c0_i32_0 : i32, i32
  }
  func.func @transform_6(%arg0: i32, %arg1: i32, %arg2: i32) -> (i32, i32, i32) {
    %c0_i32 = arith.constant 0 : i32
    %c0_i32_0 = arith.constant 0 : i32
    return %arg0, %arg1, %c0_i32 : i32, i32, i32
  }
}

</mosaic_0001>

<llo_original>
// kernel: tpu_custom_call.1
$region0: #{tpu_custom_call.1}
  #allocation0 [shape = 'u32[]', space=smem, size = 0x4, offset = 0x4, fixed_abs, tag = 'smem constant byte address 0x4 - core index']
  #allocation1 [shape = 'u32[144,128]{1,0:T(1,128)}', space=vmem, size = 0x12000, scoped, tag = 'internal scratch']
  #allocation2 [shape = 'f32[2,8,1]{2,1,0:T(8,128)}', space=vmem, size = 0x2000, scoped, tag = 'scratch operand']
  #allocation3 [shape = 'f32[2,8,1]{2,1,0:T(8,128)}', space=vmem, size = 0x2000, scoped, tag = 'scratch operand']
  #allocation4 [shape = 'f32[2,8,16]{2,1,0:T(8,128)}', space=vmem, size = 0x2000, scoped, tag = 'scratch operand']
  %s0 = inlined_call_operand.hbm [shape: bf16[2,2,8,16], index: 0, kind: input, shape index: {}]
  %s1 = inlined_call_operand.hbm [shape: bf16[2,2,8,16], index: 1, kind: input, shape index: {}]
  %s2 = inlined_call_operand.hbm [shape: bf16[2,2,8,16], index: 2, kind: input, shape index: {}]
  %s3 = inlined_call_operand.hbm [shape: bf16[2,1,8,8], index: 3, kind: input, shape index: {}]
  %s4 = inlined_call_operand.hbm [shape: bf16[2,16,32], index: 4, kind: input, shape index: {}]
  %s5 = inlined_call_operand.vmem [shape: f32[1,32], index: 5, kind: input, shape index: {}]
  %s6 = inlined_call_operand.hbm [shape: bf16[2,8,32], index: 6, kind: output, shape index: {}]
  %s7 = sld [smem:[#allocation0]]
  $region85: #{tpu_custom_call.1} parent=0
    _
  %s9 = ssub.s32 1, %s7
  %s10 = scalar_select 0, %s9, %s7
  $region1: #{tpu_custom_call.1} parent=0
    #allocation5 [shape = 'u8[8192]{0}', space=vmem, size = 0x2000, scoped, tag = 'input window, operand 0']
    #allocation6 [shape = 's32[2]{0}', space=sflag, size = 0x8, scoped, tag = 'scoped memory for tpu_custom_call.1']
    #allocation7 [shape = 's32[2]{0}', space=sflag, size = 0x8, scoped, tag = 'scoped memory for tpu_custom_call.1']
    #allocation8 [shape = 'u8[8192]{0}', space=vmem, size = 0x2000, scoped, tag = 'input window, operand 1']
    #allocation9 [shape = 's32[2]{0}', space=sflag, size = 0x8, scoped, tag = 'scoped memory for tpu_custom_call.1']
    #allocation10 [shape = 'u8[8192]{0}', space=vmem, size = 0x2000, scoped, tag = 'input window, operand 2']
    #allocation11 [shape = 'u8[4096]{0}', space=vmem, size = 0x1000, scoped, tag = 'input window, operand 3']
    #allocation12 [shape = 's32[2]{0}', space=sflag, size = 0x8, scoped, tag = 'scoped memory for tpu_custom_call.1']
    #allocation13 [shape = 'u8[8192]{0}', space=vmem, size = 0x2000, scoped, tag = 'input window, operand 4, single buffered']
    #allocation14 [shape = 'u8[4096]{0}', space=vmem, size = 0x1000, scoped, tag = 'output window, operand 0']
    %11 = vsyncpa [#allocation6], 0
    %s12 = scalar_lea.sflag [#allocation6], 1
    %13 = vsyncpa %s12, 0
    %14 = vsyncpa [#allocation9], 0
    %s15 = scalar_lea.sflag [#allocation9], 1
    %16 = vsyncpa %s15, 0
    %17 = vsyncpa [#allocation12], 0
    %s18 = scalar_lea.sflag [#allocation12], 1
    %19 = vsyncpa %s18, 0
    %20 = vsyncpa [#allocation7], 0
    %s21 = scalar_lea.sflag [#allocation7], 1
    %22 = vsyncpa %s21, 0
    loop: start=0, step=1, limit=4
    $region2: #{tpu_custom_call.1} parent=1 // loop_pre_header
      _
    $region3: #{tpu_custom_call.1} parent=1 // loop_header
      %s24 = sphi 0, %s28
      %p25 = scmp.ge.s32.totalorder %s24, 4
      %s31 = sphi 0, %s50
      %s32 = sphi 0, %s46
      %s33 = sphi 0, %s42
      %s34 = sphi 0, %s31
      %s35 = sphi 0, %s32
      %s36 = sphi 0, %s33
      %s37 = sphi 0, %s34
      %s38 = sphi 0, %s35
      %s39 = sphi 0, %s36
      %s55 = sphi 0, %s57
      %s58 = sphi 0, %s55
      %s59 = sphi 0, %s58
      %s75 = sphi 0, %s59
      %s83 = sphi 0, %s85
      %s86 = sphi 0, %s83
      %s87 = sphi 0, %s86
      %s103 = sphi 0, %s87
      %s111 = sphi 0, %s113
      %s114 = sphi 0, %s111
      %s115 = sphi 0, %s114
      %s131 = sphi 0, %s115
      %s141 = sphi 0, %s143
      %s144 = sphi 0, %s141
      %s145 = sphi 0, %s144
      %s161 = sphi 0, %s145
      %s165 = sphi 0, %s165
      %s167 = sphi 0, %s165
      %s168 = sphi 0, %s167
      %s182 = sphi 0, %s168
      %s186 = sphi 0, %s186
      %s188 = sphi 0, %s186
      %s189 = sphi 0, %s188
      %s203 = sphi 0, %s189
      %s211 = sphi 0, %s213
      %s214 = sphi 0, %s211
      %s215 = sphi 0, %s214
      %s231 = sphi 0, %s215
    $region4: #{tpu_custom_call.1} parent=1 // loop_header_branch
      %27 = sbr.rel (%p25) target = $region8
    $region5: #{tpu_custom_call.1} parent=1 // loop_body
      %s29 = ssub.s32 %s24, 1
      %s30 = ssub.s32 %s24, 2
      %s40 = sadd.s32 1, %s33
      %p41 = scmp.ge.s32.totalorder %s40, 1
      %s42 = scalar_select %p41, 0, %s40
      %s43 = sadd.s32 1, %s32
      %s44 = scalar_select %p41, %s43, %s32
      %p45 = scmp.ge.s32.totalorder %s44, 1
      %s46 = scalar_select %p45, 0, %s44
      %s47 = sadd.s32 1, %s31
      %s48 = scalar_select %p45, %s47, %s31
      %p49 = scmp.ge.s32.totalorder %s48, 2
      %s50 = scalar_select %p49, 0, %s48
      %s51 = ssub.s32 %s31, %s50
      %s52 = ssub.s32 %s32, %s46
      %s53 = sor.u32 %s51, %s52
      %p54 = scmp.eq.s32.totalorder %s53, 0
      %s56 = sadd.s32 %s55, 1
      %s57 = scalar_select %p54, %s55, %s56
      %p60 = pneg %p54
      %p61 = scmp.eq.s32.totalorder %s24, 1
      %p62 = por %p60, %p61
      %p63 = scmp.ne.s32.totalorder %s55, %s58
      %p64 = scmp.eq.s32.totalorder %s24, 0
      %p65 = por %p63, %p64
      %p66 = scmp.ne.s32.totalorder %s55, %s58
      %p67 = scmp.eq.s32.totalorder %s29, 1
      %p68 = por %p66, %p67
      %p69 = scmp.ne.s32.totalorder %s58, %s59
      %p70 = scmp.eq.s32.totalorder %s29, 0
      %p71 = por %p69, %p70
      %p72 = scmp.ne.s32.totalorder %s58, %s59
      %p73 = scmp.eq.s32.totalorder %s30, 1
      %p74 = por %p72, %p73
      %p76 = scmp.ne.s32.totalorder %s59, %s75
      %p77 = scmp.eq.s32.totalorder %s30, 0
      %p78 = por %p76, %p77
      %s79 = ssub.s32 %s31, %s50
      %s80 = ssub.s32 %s33, %s42
      %s81 = sor.u32 %s79, %s80
      %p82 = scmp.eq.s32.totalorder %s81, 0
      %s84 = sadd.s32 %s83, 1
      %s85 = scalar_select %p82, %s83, %s84
      %p88 = pneg %p82
      %p89 = scmp.eq.s32.totalorder %s24, 1
      %p90 = por %p88, %p89
      %p91 = scmp.ne.s32.totalorder %s83, %s86
      %p92 = scmp.eq.s32.totalorder %s24, 0
      %p93 = por %p91, %p92
      %p94 = scmp.ne.s32.totalorder %s83, %s86
      %p95 = scmp.eq.s32.totalorder %s29, 1
      %p96 = por %p94, %p95
      %p97 = scmp.ne.s32.totalorder %s86, %s87
      %p98 = scmp.eq.s32.totalorder %s29, 0
      %p99 = por %p97, %p98
      %p100 = scmp.ne.s32.totalorder %s86, %s87
      %p101 = scmp.eq.s32.totalorder %s30, 1
      %p102 = por %p100, %p101
      %p104 = scmp.ne.s32.totalorder %s87, %s103
      %p105 = scmp.eq.s32.totalorder %s30, 0
      %p106 = por %p104, %p105
      %s107 = ssub.s32 %s31, %s50
      %s108 = ssub.s32 %s33, %s42
      %s109 = sor.u32 %s107, %s108
      %p110 = scmp.eq.s32.totalorder %s109, 0
      %s112 = sadd.s32 %s111, 1
      %s113 = scalar_select %p110, %s111, %s112
      %p116 = pneg %p110
      %p117 = scmp.eq.s32.totalorder %s24, 1
      %p118 = por %p116, %p117
      %p119 = scmp.ne.s32.totalorder %s111, %s114
      %p120 = scmp.eq.s32.totalorder %s24, 0
      %p121 = por %p119, %p120
      %p122 = scmp.ne.s32.totalorder %s111, %s114
      %p123 = scmp.eq.s32.totalorder %s29, 1
      %p124 = por %p122, %p123
      %p125 = scmp.ne.s32.totalorder %s114, %s115
      %p126 = scmp.eq.s32.totalorder %s29, 0
      %p127 = por %p125, %p126
      %p128 = scmp.ne.s32.totalorder %s114, %s115
      %p129 = scmp.eq.s32.totalorder %s30, 1
      %p130 = por %p128, %p129
      %p132 = scmp.ne.s32.totalorder %s115, %s131
      %p133 = scmp.eq.s32.totalorder %s30, 0
      %p134 = por %p132, %p133
      %s135 = ssub.s32 %s31, %s50
      %s136 = ssub.s32 %s32, %s46
      %s137 = sor.u32 %s135, %s136
      %s138 = ssub.s32 %s33, %s42
      %s139 = sor.u32 %s137, %s138
      %p140 = scmp.eq.s32.totalorder %s139, 0
      %s142 = sadd.s32 %s141, 1
      %s143 = scalar_select %p140, %s141, %s142
      %p146 = pneg %p140
      %p147 = scmp.eq.s32.totalorder %s24, 1
      %p148 = por %p146, %p147
      %p149 = scmp.ne.s32.totalorder %s141, %s144
      %p150 = scmp.eq.s32.totalorder %s24, 0
      %p151 = por %p149, %p150
      %p152 = scmp.ne.s32.totalorder %s141, %s144
      %p153 = scmp.eq.s32.totalorder %s29, 1
      %p154 = por %p152, %p153
      %p155 = scmp.ne.s32.totalorder %s144, %s145
      %p156 = scmp.eq.s32.totalorder %s29, 0
      %p157 = por %p155, %p156
      %p158 = scmp.ne.s32.totalorder %s144, %s145
      %p159 = scmp.eq.s32.totalorder %s30, 1
      %p160 = por %p158, %p159
      %p162 = scmp.ne.s32.totalorder %s145, %s161
      %p163 = scmp.eq.s32.totalorder %s30, 0
      %p164 = por %p162, %p163
      %s166 = sadd.s32 %s165, 1
      %p169 = scmp.eq.s32.totalorder %s24, 1
      %p170 = scmp.ne.s32.totalorder %s165, %s167
      %p171 = scmp.eq.s32.totalorder %s24, 0
      %p172 = por %p170, %p171
      %p173 = scmp.ne.s32.totalorder %s165, %s167
      %p174 = scmp.eq.s32.totalorder %s29, 1
      %p175 = por %p173, %p174
      %p176 = scmp.ne.s32.totalorder %s167, %s168
      %p177 = scmp.eq.s32.totalorder %s29, 0
      %p178 = por %p176, %p177
      %p179 = scmp.ne.s32.totalorder %s167, %s168
      %p180 = scmp.eq.s32.totalorder %s30, 1
      %p181 = por %p179, %p180
      %p183 = scmp.ne.s32.totalorder %s168, %s182
      %p184 = scmp.eq.s32.totalorder %s30, 0
      %p185 = por %p183, %p184
      %s187 = sadd.s32 %s186, 1
      %p190 = scmp.eq.s32.totalorder %s24, 1
      %p191 = scmp.ne.s32.totalorder %s186, %s188
      %p192 = scmp.eq.s32.totalorder %s24, 0
      %p193 = por %p191, %p192
      %p194 = scmp.ne.s32.totalorder %s186, %s188
      %p195 = scmp.eq.s32.totalorder %s29, 1
      %p196 = por %p194, %p195
      %p197 = scmp.ne.s32.totalorder %s188, %s189
      %p198 = scmp.eq.s32.totalorder %s29, 0
      %p199 = por %p197, %p198
      %p200 = scmp.ne.s32.totalorder %s188, %s189
      %p201 = scmp.eq.s32.totalorder %s30, 1
      %p202 = por %p200, %p201
      %p204 = scmp.ne.s32.totalorder %s189, %s203
      %p205 = scmp.eq.s32.totalorder %s30, 0
      %p206 = por %p204, %p205
      %s207 = ssub.s32 %s31, %s50
      %s208 = ssub.s32 %s32, %s46
      %s209 = sor.u32 %s207, %s208
      %p210 = scmp.eq.s32.totalorder %s209, 0
      %s212 = sadd.s32 %s211, 1
      %s213 = scalar_select %p210, %s211, %s212
      %p216 = pneg %p210
      %p217 = scmp.eq.s32.totalorder %s24, 1
      %p218 = por %p216, %p217
      %p219 = scmp.ne.s32.totalorder %s211, %s214
      %p220 = scmp.eq.s32.totalorder %s24, 0
      %p221 = por %p219, %p220
      %p222 = scmp.ne.s32.totalorder %s211, %s214
      %p223 = scmp.eq.s32.totalorder %s29, 1
      %p224 = por %p222, %p223
      %p225 = scmp.ne.s32.totalorder %s214, %s215
      %p226 = scmp.eq.s32.totalorder %s29, 0
      %p227 = por %p225, %p226
      %p228 = scmp.ne.s32.totalorder %s214, %s215
      %p229 = scmp.eq.s32.totalorder %s30, 1
      %p230 = por %p228, %p229
      %p232 = scmp.ne.s32.totalorder %s215, %s231
      %p233 = scmp.eq.s32.totalorder %s30, 0
      %p234 = por %p232, %p233
      %p235 = scmp.le.s32.totalorder 1, %s24
      %p236 = scmp.lt.s32.totalorder %s24, 3
      %p237 = pnand %p235, %p236
      %p238 = pneg %p237
      // Predicated region
      $region9: #{tpu_custom_call.1} parent=5 // pred_check
        _
      $region10: #{tpu_custom_call.1} parent=5 // pred_check_branch
        %240 = sbr.rel (%p237) target = $region12
      $region11: #{tpu_custom_call.1} parent=5 // pred_region
        %s241 = ssub.s32 %s24, 1
        // Predicated region
        $region13: #{tpu_custom_call.1} parent=11 // pred_check
          %p242 = pneg %p178
        $region14: #{tpu_custom_call.1} parent=11 // pred_check_branch
          %244 = sbr.rel (%p242) target = $region16
        $region15: #{tpu_custom_call.1} parent=11 // pred_region
          %s246 = ssub.s32 256, 256
          %247 = vsyncadd [#allocation12], %s246
          %s248 = sshll.u32 [#allocation13], 4
          %s249 = int_to_ptr.vmem [resolvable:$true] %s248
          %254 = dma.hbm_to_vmem [thread:$0]  %s4, 256, %s249, [#allocation12], 64, 64, 4
        $region16: #{tpu_custom_call.1} parent=11 // pred_fallthru
          _
        // Predicated region
        $region17: #{tpu_custom_call.1} parent=11 // pred_check
          %p255 = pneg %p199
        $region18: #{tpu_custom_call.1} parent=11 // pred_check_branch
          %257 = sbr.rel (%p255) target = $region20
        $region19: #{tpu_custom_call.1} parent=11 // pred_region
          _
        $region20: #{tpu_custom_call.1} parent=11 // pred_fallthru
          _
      $region12: #{tpu_custom_call.1} parent=5 // pred_fallthru
        _
      %p258 = scmp.lt.s32.totalorder %s24, 2
      // Predicated region
      $region21: #{tpu_custom_call.1} parent=5 // pred_check
        %p259 = pneg %p258
      $region22: #{tpu_custom_call.1} parent=5 // pred_check_branch
        %261 = sbr.rel (%p259) target = $region24
      $region23: #{tpu_custom_call.1} parent=5 // pred_region
        // Predicated region
        $region25: #{tpu_custom_call.1} parent=23 // pred_check
          %p262 = pneg %p65
        $region26: #{tpu_custom_call.1} parent=23 // pred_check_branch
          %264 = sbr.rel (%p262) target = $region28
        $region27: #{tpu_custom_call.1} parent=23 // pred_region
          %s265 = sand.u32 %s55, 1
          %s266 = scalar_lea.sflag [#allocation6], %s265
          %s267 = sand.u32 %s55, 1
          %s268 = smul.addr %s267, 8
          %s269 = scalar_lea.vmem [#allocation5], %s268
          %s271 = ssub.s32 128, 128
          %272 = vsyncadd %s266, %s271
          %s273 = smul.addr %s31, 2
          %s274 = sadd.s32 %s32, %s273
          %s275 = smul.addr %s274, 64
          %s276 = scalar_lea.hbm %s0, %s275
          %s277 = sshll.u32 %s269, 4
          %s278 = int_to_ptr.vmem [resolvable:$true] %s277
          %283 = dma.hbm_to_vmem [thread:$0]  %s276, 128, %s278, %s266, 64, 64, 4
        $region28: #{tpu_custom_call.1} parent=23 // pred_fallthru
          _
        // Predicated region
        $region29: #{tpu_custom_call.1} parent=23 // pred_check
          %p284 = pneg %p93
        $region30: #{tpu_custom_call.1} parent=23 // pred_check_branch
          %286 = sbr.rel (%p284) target = $region32
        $region31: #{tpu_custom_call.1} parent=23 // pred_region
          %s287 = sand.u32 %s24, 1
          %s288 = scalar_lea.sflag [#allocation9], %s287
          %s289 = sand.u32 %s83, 1
          %s290 = smul.addr %s289, 8
          %s291 = scalar_lea.vmem [#allocation8], %s290
          %s293 = ssub.s32 128, 128
          %294 = vsyncadd %s288, %s293
          %s295 = smul.addr %s31, 2
          %s296 = sadd.s32 %s33, %s295
          %s297 = smul.addr %s296, 64
          %s298 = scalar_lea.hbm %s1, %s297
          %s299 = sshll.u32 %s291, 4
          %s300 = int_to_ptr.vmem [resolvable:$true] %s299
          %305 = dma.hbm_to_vmem [thread:$0]  %s298, 128, %s300, %s288, 64, 64, 4
        $region32: #{tpu_custom_call.1} parent=23 // pred_fallthru
          _
        // Predicated region
        $region33: #{tpu_custom_call.1} parent=23 // pred_check
          %p306 = pneg %p121
        $region34: #{tpu_custom_call.1} parent=23 // pred_check_branch
          %308 = sbr.rel (%p306) target = $region36
        $region35: #{tpu_custom_call.1} parent=23 // pred_region
          %s309 = sand.u32 %s24, 1
          %s310 = scalar_lea.sflag [#allocation9], %s309
          %s311 = sand.u32 %s111, 1
          %s312 = smul.addr %s311, 8
          %s313 = scalar_lea.vmem [#allocation10], %s312
          %s315 = ssub.s32 128, 128
          %316 = vsyncadd %s310, %s315
          %s317 = smul.addr %s31, 2
          %s318 = sadd.s32 %s33, %s317
          %s319 = smul.addr %s318, 64
          %s320 = scalar_lea.hbm %s2, %s319
          %s321 = sshll.u32 %s313, 4
          %s322 = int_to_ptr.vmem [resolvable:$true] %s321
          %327 = dma.hbm_to_vmem [thread:$0]  %s320, 128, %s322, %s310, 64, 64, 4
        $region36: #{tpu_custom_call.1} parent=23 // pred_fallthru
          _
        // Predicated region
        $region37: #{tpu_custom_call.1} parent=23 // pred_check
          %p328 = pneg %p151
        $region38: #{tpu_custom_call.1} parent=23 // pred_check_branch
          %330 = sbr.rel (%p328) target = $region40
        $region39: #{tpu_custom_call.1} parent=23 // pred_region
          %s331 = sand.u32 %s24, 1
          %s332 = scalar_lea.sflag [#allocation12], %s331
          %s333 = sand.u32 %s141, 1
          %s334 = smul.addr %s333, 4
          %s335 = scalar_lea.vmem [#allocation11], %s334
          %s337 = ssub.s32 64, 64
          %338 = vsyncadd %s332, %s337
          %s339 = sadd.s32 %s33, %s32
          %s340 = sadd.s32 %s339, %s31
          %s341 = smul.addr %s340, 64
          %s342 = scalar_lea.hbm %s3, %s341
          %s344 = sshll.u32 %s335, 4
          %s345 = int_to_ptr.vmem [resolvable:$true] %s344
          %347 = dma.hbm_to_vmem [thread:$0]  %s342, 64, %s345, %s332
        $region40: #{tpu_custom_call.1} parent=23 // pred_fallthru
          _
      $region24: #{tpu_custom_call.1} parent=5 // pred_fallthru
        _
      %p348 = scmp.le.s32.totalorder 1, %s24
      %p349 = scmp.lt.s32.totalorder %s24, 3
      %p350 = pnand %p348, %p349
      %p351 = pneg %p350
      // Predicated region
      $region41: #{tpu_custom_call.1} parent=5 // pred_check
        _
      $region42: #{tpu_custom_call.1} parent=5 // pred_check_branch
        %353 = sbr.rel (%p350) target = $region44
      $region43: #{tpu_custom_call.1} parent=5 // pred_region
        %s354 = ssub.s32 %s24, 1
        %s355 = sand.u32 %s58, 1
        %s356 = scalar_lea.sflag [#allocation6], %s355
        %s357 = sand.u32 %s58, 1
        %s358 = smul.addr %s357, 8
        %s359 = scalar_lea.vmem [#allocation5], %s358
        // Predicated region
        $region45: #{tpu_custom_call.1} parent=43 // pred_check
          %p360 = pneg %p71
        $region46: #{tpu_custom_call.1} parent=43 // pred_check_branch
          %362 = sbr.rel (%p360) target = $region48
        $region47: #{tpu_custom_call.1} parent=43 // pred_region
          %363 = dma.done %s356, 128
        $region48: #{tpu_custom_call.1} parent=43 // pred_fallthru
          _
        %s364 = sand.u32 %s29, 1
        %s365 = scalar_lea.sflag [#allocation9], %s364
        %s366 = sand.u32 %s86, 1
        %s367 = smul.addr %s366, 8
        %s368 = scalar_lea.vmem [#allocation8], %s367
        // Predicated region
        $region49: #{tpu_custom_call.1} parent=43 // pred_check
          %p369 = pneg %p99
        $region50: #{tpu_custom_call.1} parent=43 // pred_check_branch
          %371 = sbr.rel (%p369) target = $region52
        $region51: #{tpu_custom_call.1} parent=43 // pred_region
          %372 = dma.done %s365, 128
        $region52: #{tpu_custom_call.1} parent=43 // pred_fallthru
          _
        %s373 = sand.u32 %s29, 1
        %s374 = scalar_lea.sflag [#allocation9], %s373
        %s375 = sand.u32 %s114, 1
        %s376 = smul.addr %s375, 8
        %s377 = scalar_lea.vmem [#allocation10], %s376
        // Predicated region
        $region53: #{tpu_custom_call.1} parent=43 // pred_check
          %p378 = pneg %p127
        $region54: #{tpu_custom_call.1} parent=43 // pred_check_branch
          %380 = sbr.rel (%p378) target = $region56
        $region55: #{tpu_custom_call.1} parent=43 // pred_region
          %381 = dma.done %s374, 128
        $region56: #{tpu_custom_call.1} parent=43 // pred_fallthru
          _
        %s382 = sand.u32 %s29, 1
        %s383 = scalar_lea.sflag [#allocation12], %s382
        %s384 = sand.u32 %s144, 1
        %s385 = smul.addr %s384, 4
        %s386 = scalar_lea.vmem [#allocation11], %s385
        // Predicated region
        $region57: #{tpu_custom_call.1} parent=43 // pred_check
          %p387 = pneg %p157
        $region58: #{tpu_custom_call.1} parent=43 // pred_check_branch
          %389 = sbr.rel (%p387) target = $region60
        $region59: #{tpu_custom_call.1} parent=43 // pred_region
          %390 = dma.done %s383, 64
        $region60: #{tpu_custom_call.1} parent=43 // pred_fallthru
          _
        // Predicated region
        $region61: #{tpu_custom_call.1} parent=43 // pred_check
          %p391 = pneg %p178
        $region62: #{tpu_custom_call.1} parent=43 // pred_check_branch
          %393 = sbr.rel (%p391) target = $region64
        $region63: #{tpu_custom_call.1} parent=43 // pred_region
          %394 = dma.done [#allocation12], 256
        $region64: #{tpu_custom_call.1} parent=43 // pred_fallthru
          _
        %s395 = sand.u32 %s58, 1
        %s396 = scalar_lea.sflag [#allocation6], %s395
        %s397 = sand.u32 %s58, 1
        %s398 = smul.addr %s397, 8
        %s399 = scalar_lea.vmem [#allocation5], %s398
        %p400 = pneg %p71
        %p401 = pneg %p68
        %s402 = sand.u32 %s29, 1
        %s403 = scalar_lea.sflag [#allocation9], %s402
        %s404 = sand.u32 %s86, 1
        %s405 = smul.addr %s404, 8
        %s406 = scalar_lea.vmem [#allocation8], %s405
        %p407 = pneg %p99
        %p408 = pneg %p96
        %s409 = sand.u32 %s29, 1
        %s410 = scalar_lea.sflag [#allocation9], %s409
        %s411 = sand.u32 %s114, 1
        %s412 = smul.addr %s411, 8
        %s413 = scalar_lea.vmem [#allocation10], %s412
        %p414 = pneg %p127
        %p415 = pneg %p124
        %s416 = sand.u32 %s29, 1
        %s417 = scalar_lea.sflag [#allocation12], %s416
        %s418 = sand.u32 %s144, 1
        %s419 = smul.addr %s418, 4
        %s420 = scalar_lea.vmem [#allocation11], %s419
        %p421 = pneg %p157
        %p422 = pneg %p154
        %p423 = pneg %p178
        %p424 = pneg %p175
        %p425 = pneg %p199
        %p426 = pneg %p196
        %p427 = pneg %p227
        %p428 = pneg %p224
        %s429 = sand.u32 %s214, 1
        %s430 = scalar_lea.sflag [#allocation7], %s429
        %s431 = sand.u32 %s214, 1
        %s432 = smul.addr %s431, 4
        %s433 = scalar_lea.vmem [#allocation14], %s432
        %p435 = scmp.eq.s32.totalorder %s36, 0
        // Predicated region
        $region65: #{tpu_custom_call.1} parent=43 // pred_check
          %p436 = pneg %p435
        $region66: #{tpu_custom_call.1} parent=43 // pred_check_branch
          %438 = sbr.rel (%p436) target = $region68
        $region67: #{tpu_custom_call.1} parent=43 // pred_region
          %vm439 = vcmask 7168
          %440 = vst.msk [vmem:[#allocation2] sm:$0xff] %vm439, -inf
          %441 = vst.msk [vmem:[#allocation2 + $0x8] sm:$0xff] %vm439, -inf
          %442 = vst.msk [vmem:[#allocation3] sm:$0xff] %vm439, 0.0
          %443 = vst.msk [vmem:[#allocation3 + $0x8] sm:$0xff] %vm439, 0.0
          %vm444 = vcmask 130048
          %445 = vst.msk [vmem:[#allocation4] sm:$0xff] %vm444, 0.0
          %446 = vst.msk [vmem:[#allocation4 + $0x8] sm:$0xff] %vm444, 0.0
        $region68: #{tpu_custom_call.1} parent=43 // pred_fallthru
          _
        %v447 = vld [vmem:[%s359] sm:$0xf]
        %v448 = vld [vmem:[%s359 + $0x4] sm:$0xf]
        %v449 = vld [vmem:[%s368] sm:$0xf]
        %v450 = vld [vmem:[%s368 + $0x4] sm:$0xf]
        %v451 = vld [vmem:[%s377] sm:$0xf]
        %v452 = vld [vmem:[%s377 + $0x4] sm:$0xf]
        %v453 = vld [vmem:[%s386] sm:$0xf]
        %vm454 = vcmask 130048
        %v456 = vsel %vm454, %v447, 0
        %v459 = vsel %vm454, %v449, 0
        %461 = vmatprep.subr.bf16.mxu0 0
        %462 = vmatpush1.bf16.xpose.msra.mxu0 0
        %463 = vmatprep.subr.bf16.mxu0 0
        %464 = vmatpush1.bf16.xpose.msra.mxu0 0
        %465 = vmatprep.subr.bf16.mxu0 0
        %466 = vmatpush1.bf16.xpose.msra.mxu0 0
        %467 = vmatprep.subr.bf16.mxu0 0
        %468 = vmatpush1.bf16.xpose.msra.mxu0 0
        %469 = vmatprep.subr.bf16.mxu0 0
        %470 = vmatpush1.bf16.xpose.msra.mxu0 0
        %471 = vmatprep.subr.bf16.mxu0 0
        %472 = vmatpush1.bf16.xpose.msra.mxu0 0
        %473 = vmatprep.subr.bf16.mxu0 0
        %474 = vmatpush1.bf16.xpose.msra.mxu0 0
        %475 = vmatprep.subr.bf16.mxu0 0
        %476 = vmatpush1.bf16.xpose.msra.mxu0 %v459
        %477 = vmatprep.subr.bf16.mxu0 0
        %478 = vmatpush2.bf16.xpose.msra.mxu0 0
        %479 = vmatprep.subr.bf16.mxu0 0
        %480 = vmatpush2.bf16.xpose.msra.mxu0 0
        %481 = vmatprep.subr.bf16.mxu0 0
        %482 = vmatpush2.bf16.xpose.msra.mxu0 0
        %483 = vmatprep.subr.bf16.mxu0 0
        %484 = vmatpush2.bf16.xpose.msra.mxu0 0
        %485 = vmatprep.subr.bf16.mxu0 0
        %486 = vmatpush2.bf16.xpose.msra.mxu0 0
        %487 = vmatprep.subr.bf16.mxu0 0
        %488 = vmatpush2.bf16.xpose.msra.mxu0 0
        %489 = vmatprep.subr.bf16.mxu0 0
        %490 = vmatpush2.bf16.xpose.msra.mxu0 0
        %491 = vmatprep.subr.bf16.mxu0 0
        %492 = vmatpush2.bf16.xpose.msra.mxu0 0
        %493 = vmatprep.mubr.bf16.mxu0 0
        %494 = vmatmul.mubr.bf16.gmra.mxu0 %v456
        %v495 = vpop.f32.mrf.mxu0
        %v496 = vadd.f32 0.0, %v495
        %v497 = vpop.f32.mrf.mxu0
        %v498 = vpop.f32.mrf.mxu0
        %v499 = vpop.f32.mrf.mxu0
        %500 = vdwg.mxu0
        %v502 = vsel %vm454, %v448, 0
        %v505 = vsel %vm454, %v450, 0
        %507 = vmatprep.subr.bf16.mxu0 0
        %508 = vmatpush1.bf16.xpose.msra.mxu0 0
        %509 = vmatprep.subr.bf16.mxu0 0
        %510 = vmatpush1.bf16.xpose.msra.mxu0 0
        %511 = vmatprep.subr.bf16.mxu0 0
        %512 = vmatpush1.bf16.xpose.msra.mxu0 0
        %513 = vmatprep.subr.bf16.mxu0 0
        %514 = vmatpush1.bf16.xpose.msra.mxu0 0
        %515 = vmatprep.subr.bf16.mxu0 0
        %516 = vmatpush1.bf16.xpose.msra.mxu0 0
        %517 = vmatprep.subr.bf16.mxu0 0
        %518 = vmatpush1.bf16.xpose.msra.mxu0 0
        %519 = vmatprep.subr.bf16.mxu0 0
        %520 = vmatpush1.bf16.xpose.msra.mxu0 0
        %521 = vmatprep.subr.bf16.mxu0 0
        %522 = vmatpush1.bf16.xpose.msra.mxu0 %v505
        %523 = vmatprep.subr.bf16.mxu0 0
        %524 = vmatpush2.bf16.xpose.msra.mxu0 0
        %525 = vmatprep.subr.bf16.mxu0 0
        %526 = vmatpush2.bf16.xpose.msra.mxu0 0
        %527 = vmatprep.subr.bf16.mxu0 0
        %528 = vmatpush2.bf16.xpose.msra.mxu0 0
        %529 = vmatprep.subr.bf16.mxu0 0
        %530 = vmatpush2.bf16.xpose.msra.mxu0 0
        %531 = vmatprep.subr.bf16.mxu0 0
        %532 = vmatpush2.bf16.xpose.msra.mxu0 0
        %533 = vmatprep.subr.bf16.mxu0 0
        %534 = vmatpush2.bf16.xpose.msra.mxu0 0
        %535 = vmatprep.subr.bf16.mxu0 0
        %536 = vmatpush2.bf16.xpose.msra.mxu0 0
        %537 = vmatprep.subr.bf16.mxu0 0
        %538 = vmatpush2.bf16.xpose.msra.mxu0 0
        %539 = vmatprep.mubr.bf16.mxu0 0
        %540 = vmatmul.mubr.bf16.gmra.mxu0 %v502
        %v541 = vpop.f32.mrf.mxu0
        %v542 = vadd.f32 0.0, %v541
        %v543 = vpop.f32.mrf.mxu0
        %v544 = vpop.f32.mrf.mxu0
        %v545 = vpop.f32.mrf.mxu0
        %546 = vdwg.mxu0
        %v547 = vmul.f32 %v496, 0.17677669
        %v548 = vmul.f32 %v542, 0.17677669
        %v549 = vunpack.c.l.bf16 %v453
        %v550 = vadd.f32 %v547, %v549
        %v551 = vadd.f32 %v548, %v549
        %v552 = vld [vmem:[#allocation2] sm:$0xff]
        %v553 = vld [vmem:[#allocation2 + $0x8] sm:$0xff]
        %vm554 = vcmask 64512
        %v555 = vsel %vm554, %v550, -inf
        %556 = vmax.xlane.f32.xlu0 %v555
        %v557 = vpop.xlane.xlu0 %556
        %v558 = vsel %vm554, %v551, -inf
        %559 = vmax.xlane.f32.xlu0 %v558
        %v560 = vpop.xlane.xlu0 %559
        %v561 = vmax.f32 %v552, %v557
        %v562 = vmax.f32 %v553, %v560
        %v563 = vsub.f32 %v552, %v561
        %v564 = vsub.f32 %v553, %v562
        %v565 = vmul.f32 %v563, 1.442695
        %v566 = vpow.pop %v565
        %v567 = vmul.f32 %v564, 1.442695
        %v568 = vpow.pop %v567
        %570 = vset.pattern.permute.xlu0 0
        %571 = vperm.xlu0 %570, %v561
        %v572 = vpop.permute.xlu0 %571
        %575 = vset.pattern.permute.xlu0 0
        %576 = vperm.xlu0 %575, %v562
        %v577 = vpop.permute.xlu0 %576
        %v579 = vsub.f32 %v550, %v572
        %v580 = vsub.f32 %v551, %v577
        %v581 = vmul.f32 %v579, 1.442695
        %v582 = vpow.pop %v581
        %v583 = vmul.f32 %v580, 1.442695
        %v584 = vpow.pop %v583
        %v585 = vld [vmem:[#allocation3] sm:$0xff]
        %v586 = vld [vmem:[#allocation3 + $0x8] sm:$0xff]
        %v587 = vmul.f32 %v566, %v585
        %v588 = vmul.f32 %v568, %v586
        %v589 = vsel %vm554, %v582, 0.0
        %590 = vadd.xlane.f32.xlu0 %v589
        %v591 = vpop.xlane.xlu0 %590
        %v592 = vsel %vm554, %v584, 0.0
        %593 = vadd.xlane.f32.xlu0 %v592
        %v594 = vpop.xlane.xlu0 %593
        %v595 = vadd.f32 %v587, %v591
        %v596 = vadd.f32 %v588, %v594
        %vm597 = vcmask 7168
        %598 = vst.msk [vmem:[#allocation3] sm:$0xff] %vm597, %v595
        %599 = vst.msk [vmem:[#allocation3 + $0x8] sm:$0xff] %vm597, %v596
        %v600 = vld [vmem:[#allocation4] sm:$0xff]
        %v601 = vld [vmem:[#allocation4 + $0x8] sm:$0xff]
        %603 = vset.pattern.permute.xlu0 0
        %604 = vperm.xlu0 %603, %v566
        %v605 = vpop.permute.xlu0 %604
        %608 = vset.pattern.permute.xlu0 0
        %609 = vperm.xlu0 %608, %v568
        %v610 = vpop.permute.xlu0 %609
        %v612 = vmul.f32 %v605, %v600
        %v613 = vmul.f32 %v610, %v601
        %v614 = vpack.c.bf16 %v582, %v582
        %v615 = vpack.c.bf16 %v584, %v584
        %v617 = vsel %vm554, %v614, 0
        %vm619 = vcmask 1043456
        %v621 = vsel %vm619, %v451, 0
        %623 = vmatprep.subr.bf16.mxu0 0
        %624 = vmatpush1.bf16.msra.mxu0 0
        %625 = vmatprep.subr.bf16.mxu0 0
        %626 = vmatpush1.bf16.msra.mxu0 0
        %627 = vmatprep.subr.bf16.mxu0 0
        %628 = vmatpush1.bf16.msra.mxu0 0
        %629 = vmatprep.subr.bf16.mxu0 0
        %630 = vmatpush1.bf16.msra.mxu0 0
        %631 = vmatprep.subr.bf16.mxu0 0
        %632 = vmatpush1.bf16.msra.mxu0 0
        %633 = vmatprep.subr.bf16.mxu0 0
        %634 = vmatpush1.bf16.msra.mxu0 0
        %635 = vmatprep.subr.bf16.mxu0 0
        %636 = vmatpush1.bf16.msra.mxu0 0
        %637 = vmatprep.subr.bf16.mxu0 0
        %638 = vmatpush1.bf16.msra.mxu0 %v621
        %639 = vmatprep.subr.bf16.mxu0 0
        %640 = vmatpush2.bf16.msra.mxu0 0
        %641 = vmatprep.subr.bf16.mxu0 0
        %642 = vmatpush2.bf16.msra.mxu0 0
        %643 = vmatprep.subr.bf16.mxu0 0
        %644 = vmatpush2.bf16.msra.mxu0 0
        %645 = vmatprep.subr.bf16.mxu0 0
        %646 = vmatpush2.bf16.msra.mxu0 0
        %647 = vmatprep.subr.bf16.mxu0 0
        %648 = vmatpush2.bf16.msra.mxu0 0
        %649 = vmatprep.subr.bf16.mxu0 0
        %650 = vmatpush2.bf16.msra.mxu0 0
        %651 = vmatprep.subr.bf16.mxu0 0
        %652 = vmatpush2.bf16.msra.mxu0 0
        %653 = vmatprep.subr.bf16.mxu0 0
        %654 = vmatpush2.bf16.msra.mxu0 0
        %655 = vmatprep.mubr.bf16.mxu0 0
        %656 = vmatmul.mubr.bf16.gmra.mxu0 %v617
        %v657 = vpop.f32.mrf.mxu0
        %v658 = vadd.f32 0.0, %v657
        %v659 = vpop.f32.mrf.mxu0
        %v660 = vpop.f32.mrf.mxu0
        %v661 = vpop.f32.mrf.mxu0
        %662 = vdwg.mxu0
        %v664 = vsel %vm554, %v615, 0
        %v667 = vsel %vm619, %v452, 0
        %669 = vmatprep.subr.bf16.mxu0 0
        %670 = vmatpush1.bf16.msra.mxu0 0
        %671 = vmatprep.subr.bf16.mxu0 0
        %672 = vmatpush1.bf16.msra.mxu0 0
        %673 = vmatprep.subr.bf16.mxu0 0
        %674 = vmatpush1.bf16.msra.mxu0 0
        %675 = vmatprep.subr.bf16.mxu0 0
        %676 = vmatpush1.bf16.msra.mxu0 0
        %677 = vmatprep.subr.bf16.mxu0 0
        %678 = vmatpush1.bf16.msra.mxu0 0
        %679 = vmatprep.subr.bf16.mxu0 0
        %680 = vmatpush1.bf16.msra.mxu0 0
        %681 = vmatprep.subr.bf16.mxu0 0
        %682 = vmatpush1.bf16.msra.mxu0 0
        %683 = vmatprep.subr.bf16.mxu0 0
        %684 = vmatpush1.bf16.msra.mxu0 %v667
        %685 = vmatprep.subr.bf16.mxu0 0
        %686 = vmatpush2.bf16.msra.mxu0 0
        %687 = vmatprep.subr.bf16.mxu0 0
        %688 = vmatpush2.bf16.msra.mxu0 0
        %689 = vmatprep.subr.bf16.mxu0 0
        %690 = vmatpush2.bf16.msra.mxu0 0
        %691 = vmatprep.subr.bf16.mxu0 0
        %692 = vmatpush2.bf16.msra.mxu0 0
        %693 = vmatprep.subr.bf16.mxu0 0
        %694 = vmatpush2.bf16.msra.mxu0 0
        %695 = vmatprep.subr.bf16.mxu0 0
        %696 = vmatpush2.bf16.msra.mxu0 0
        %697 = vmatprep.subr.bf16.mxu0 0
        %698 = vmatpush2.bf16.msra.mxu0 0
        %699 = vmatprep.subr.bf16.mxu0 0
        %700 = vmatpush2.bf16.msra.mxu0 0
        %701 = vmatprep.mubr.bf16.mxu0 0
        %702 = vmatmul.mubr.bf16.gmra.mxu0 %v664
        %v703 = vpop.f32.mrf.mxu0
        %v704 = vadd.f32 0.0, %v703
        %v705 = vpop.f32.mrf.mxu0
        %v706 = vpop.f32.mrf.mxu0
        %v707 = vpop.f32.mrf.mxu0
        %708 = vdwg.mxu0
        %v709 = vadd.f32 %v612, %v658
        %v710 = vadd.f32 %v613, %v704
        %711 = vst.msk [vmem:[#allocation4] sm:$0xff] %vm454, %v709
        %712 = vst.msk [vmem:[#allocation4 + $0x8] sm:$0xff] %vm454, %v710
        %713 = vst.msk [vmem:[#allocation2] sm:$0xff] %vm597, %v561
        %714 = vst.msk [vmem:[#allocation2 + $0x8] sm:$0xff] %vm597, %v562
        // Predicated region
        $region69: #{tpu_custom_call.1} parent=43 // pred_check
          %p715 = pneg %p435
        $region70: #{tpu_custom_call.1} parent=43 // pred_check_branch
          %717 = sbr.rel (%p715) target = $region72
        $region71: #{tpu_custom_call.1} parent=43 // pred_region
          %v718 = vld [vmem:[#allocation4] sm:$0xff]
          %v719 = vld [vmem:[#allocation4 + $0x8] sm:$0xff]
          %v720 = vld [vmem:[#allocation3] sm:$0xff]
          %v721 = vld [vmem:[#allocation3 + $0x8] sm:$0xff]
          %v722 = vrcp.pop %v720
          %v723 = vrcp.pop %v721
          %725 = vset.pattern.permute.xlu0 0
          %726 = vperm.xlu0 %725, %v722
          %v727 = vpop.permute.xlu0 %726
          %730 = vset.pattern.permute.xlu0 0
          %731 = vperm.xlu0 %730, %v723
          %v732 = vpop.permute.xlu0 %731
          %v734 = vmul.f32 %v718, %v727
          %v735 = vmul.f32 %v719, %v732
          %v736 = vpack.c.bf16 %v734, %v734
          %v737 = vld [vmem:[#allocation13] sm:$0xf]
          %v738 = vld [vmem:[#allocation13 + $0x4] sm:$0xf]
          %v739 = vpack.c.bf16 %v735, %v735
          %s740 = scalar_lea.vmem [#allocation13], 8
          %v741 = vld [vmem:[%s740] sm:$0xf]
          %v742 = vld [vmem:[%s740 + $0x4] sm:$0xf]
          %v745 = vunpack.c.l.b16 %v741
          %v746 = vunpack.c.l.b16 %v742
          %v747 = vpack.c.b16 %v746, %v745
          %v750 = vsel %vm454, %v739, 0
          %752 = vmatprep.subr.bf16.mxu0 0
          %753 = vmatpush1.bf16.msra.mxu0 0
          %754 = vmatprep.subr.bf16.mxu0 0
          %755 = vmatpush1.bf16.msra.mxu0 0
          %756 = vmatprep.subr.bf16.mxu0 0
          %757 = vmatpush1.bf16.msra.mxu0 0
          %758 = vmatprep.subr.bf16.mxu0 0
          %759 = vmatpush1.bf16.msra.mxu0 0
          %760 = vmatprep.subr.bf16.mxu0 0
          %761 = vmatpush1.bf16.msra.mxu0 0
          %762 = vmatprep.subr.bf16.mxu0 0
          %763 = vmatpush1.bf16.msra.mxu0 0
          %764 = vmatprep.subr.bf16.mxu0 0
          %765 = vmatpush1.bf16.msra.mxu0 0
          %766 = vmatprep.subr.bf16.mxu0 0
          %767 = vmatpush1.bf16.msra.mxu0 %v747
          %768 = vmatprep.subr.bf16.mxu0 0
          %769 = vmatpush2.bf16.msra.mxu0 0
          %770 = vmatprep.subr.bf16.mxu0 0
          %771 = vmatpush2.bf16.msra.mxu0 0
          %772 = vmatprep.subr.bf16.mxu0 0
          %773 = vmatpush2.bf16.msra.mxu0 0
          %774 = vmatprep.subr.bf16.mxu0 0
          %775 = vmatpush2.bf16.msra.mxu0 0
          %776 = vmatprep.subr.bf16.mxu0 0
          %777 = vmatpush2.bf16.msra.mxu0 0
          %778 = vmatprep.subr.bf16.mxu0 0
          %779 = vmatpush2.bf16.msra.mxu0 0
          %780 = vmatprep.subr.bf16.mxu0 0
          %781 = vmatpush2.bf16.msra.mxu0 0
          %782 = vmatprep.subr.bf16.mxu0 0
          %783 = vmatpush2.bf16.msra.mxu0 0
          %784 = vmatprep.mubr.bf16.mxu0 0
          %785 = vmatmul.mubr.bf16.gmra.mxu0 %v750
          %v786 = vpop.f32.mrf.mxu0
          %v787 = vadd.f32 0.0, %v786
          %v788 = vpop.f32.mrf.mxu0
          %v789 = vpop.f32.mrf.mxu0
          %v790 = vpop.f32.mrf.mxu0
          %791 = vdwg.mxu0
          %v794 = vunpack.c.l.b16 %v737
          %v795 = vunpack.c.l.b16 %v738
          %v796 = vpack.c.b16 %v795, %v794
          %v799 = vsel %vm454, %v736, 0
          %801 = vmatprep.subr.bf16.mxu0 0
          %802 = vmatpush1.bf16.msra.mxu0 0
          %803 = vmatprep.subr.bf16.mxu0 0
          %804 = vmatpush1.bf16.msra.mxu0 0
          %805 = vmatprep.subr.bf16.mxu0 0
          %806 = vmatpush1.bf16.msra.mxu0 0
          %807 = vmatprep.subr.bf16.mxu0 0
          %808 = vmatpush1.bf16.msra.mxu0 0
          %809 = vmatprep.subr.bf16.mxu0 0
          %810 = vmatpush1.bf16.msra.mxu0 0
          %811 = vmatprep.subr.bf16.mxu0 0
          %812 = vmatpush1.bf16.msra.mxu0 0
          %813 = vmatprep.subr.bf16.mxu0 0
          %814 = vmatpush1.bf16.msra.mxu0 0
          %815 = vmatprep.subr.bf16.mxu0 0
          %816 = vmatpush1.bf16.msra.mxu0 %v796
          %817 = vmatprep.subr.bf16.mxu0 0
          %818 = vmatpush2.bf16.msra.mxu0 0
          %819 = vmatprep.subr.bf16.mxu0 0
          %820 = vmatpush2.bf16.msra.mxu0 0
          %821 = vmatprep.subr.bf16.mxu0 0
          %822 = vmatpush2.bf16.msra.mxu0 0
          %823 = vmatprep.subr.bf16.mxu0 0
          %824 = vmatpush2.bf16.msra.mxu0 0
          %825 = vmatprep.subr.bf16.mxu0 0
          %826 = vmatpush2.bf16.msra.mxu0 0
          %827 = vmatprep.subr.bf16.mxu0 0
          %828 = vmatpush2.bf16.msra.mxu0 0
          %829 = vmatprep.subr.bf16.mxu0 0
          %830 = vmatpush2.bf16.msra.mxu0 0
          %831 = vmatprep.subr.bf16.mxu0 0
          %832 = vmatpush2.bf16.msra.mxu0 0
          %833 = vmatprep.mubr.bf16.mxu0 0
          %834 = vmatmul.mubr.bf16.gmra.mxu0 %v799
          %v835 = vpop.f32.mrf.mxu0
          %v836 = vadd.f32 %v787, %v835
          %v837 = vpop.f32.mrf.mxu0
          %v838 = vpop.f32.mrf.mxu0
          %v839 = vpop.f32.mrf.mxu0
          %840 = vdwg.mxu0
          %v841 = vld [vmem:[%s5] sm:$0x1]
          %v843 = vlaneseq
          %v844 = vshrl.u32 %v843, 7
          %v845 = vsub.s32 0, %v844
          %v846 = vrot.slane %v841, %v845
          %v848 = vadd.f32 %v836, %v846
          %v849 = vpack.c.bf16 %v848, %v848
          %vm850 = vcmask 257024
          %851 = vst.msk [vmem:[%s433] sm:$0xf] %vm850, %v849
        $region72: #{tpu_custom_call.1} parent=43 // pred_fallthru
          _
        %s852 = sand.u32 %s214, 1
        %s853 = scalar_lea.sflag [#allocation7], %s852
        %s854 = sand.u32 %s214, 1
        %s855 = smul.addr %s854, 4
        %s856 = scalar_lea.vmem [#allocation14], %s855
        // Predicated region
        $region73: #{tpu_custom_call.1} parent=43 // pred_check
          %p857 = pneg %p224
        $region74: #{tpu_custom_call.1} parent=43 // pred_check_branch
          %859 = sbr.rel (%p857) target = $region76
        $region75: #{tpu_custom_call.1} parent=43 // pred_region
          %s861 = ssub.s32 64, 64
          %862 = vsyncadd %s853, %s861
          %s863 = sadd.s32 %s35, %s34
          %s864 = smul.addr %s863, 64
          %s865 = scalar_lea.hbm %s6, %s864
          %s867 = sshll.u32 %s856, 4
          %s868 = int_to_ptr.vmem [resolvable:$true] %s867
          %870 = dma.vmem_to_hbm [thread:$0]  %s868, 64, %s865, %s853
        $region76: #{tpu_custom_call.1} parent=43 // pred_fallthru
          _
      $region44: #{tpu_custom_call.1} parent=5 // pred_fallthru
        _
      %p871 = scmp.le.s32.totalorder 2, %s24
      // Predicated region
      $region77: #{tpu_custom_call.1} parent=5 // pred_check
        %p872 = pneg %p871
      $region78: #{tpu_custom_call.1} parent=5 // pred_check_branch
        %874 = sbr.rel (%p872) target = $region80
      $region79: #{tpu_custom_call.1} parent=5 // pred_region
        %s875 = ssub.s32 %s24, 2
        // Predicated region
        $region81: #{tpu_custom_call.1} parent=79 // pred_check
          %p876 = pneg %p230
        $region82: #{tpu_custom_call.1} parent=79 // pred_check_branch
          %878 = sbr.rel (%p876) target = $region84
        $region83: #{tpu_custom_call.1} parent=79 // pred_region
          %s879 = sand.u32 %s215, 1
          %s880 = scalar_lea.sflag [#allocation7], %s879
          %s881 = sand.u32 %s215, 1
          %s882 = smul.addr %s881, 4
          %s883 = scalar_lea.vmem [#allocation14], %s882
          %884 = dma.done %s880, 64
        $region84: #{tpu_custom_call.1} parent=79 // pred_fallthru
          _
      $region80: #{tpu_custom_call.1} parent=5 // pred_fallthru
        _
    $region6: #{tpu_custom_call.1} parent=1 // loop_footer
      %s28 = sadd.s32 1, %s24
    $region7: #{tpu_custom_call.1} parent=1 // loop_footer_branch
      %23 = sbr.rel target = $region3
    $region8: #{tpu_custom_call.1} parent=1 // loop_exit
      _
    %885 = vsyncpa [#allocation6], 1
    %s886 = scalar_lea.sflag [#allocation6], 1
    %887 = vsyncpa %s886, 1
    %888 = vsyncpa [#allocation9], 1
    %s889 = scalar_lea.sflag [#allocation9], 1
    %890 = vsyncpa %s889, 1
    %891 = vsyncpa [#allocation12], 1
    %s892 = scalar_lea.sflag [#allocation12], 1
    %893 = vsyncpa %s892, 1
    %894 = vsyncpa [#allocation7], 1
    %s895 = scalar_lea.sflag [#allocation7], 1
    %896 = vsyncpa %s895, 1

</llo_original>
